<compile_context>
chip_gen: v6e
topology: v6e:2x2x1
jax: 0.10.0
libtpu: 0.0.40
codegen_flags: <defaults>
</compile_context>

<pallas_src>
import jax
import jax.numpy as jnp
from jax.experimental import pallas as pl
from jax.experimental.pallas import tpu as pltpu


def _embedding_gather_kernel(ids_ref,      # SMEM (N_pad,) int32   (scalar prefetch)
                             table_ref,    # HBM  (V, Dp)          (pl.ANY, no auto-DMA)
                             out_ref,      # VMEM (tile_n, Dp)     output tile
                             buf_ref,      # VMEM (tile_n, Dp)     gather scratch
                             sems):        # DMA semaphores (tile_n,)
    i = pl.program_id(0)
    tile_n = out_ref.shape[0]

    # Issue all row DMAs for this tile first, then wait on all of them; the
    # copies overlap each other (pure HBM gather, no compute in this kernel).
    copies = []
    for j in range(tile_n):  # static unroll: tile_n is a small compile-time const
        row = ids_ref[i * tile_n + j]
        cp = pltpu.make_async_copy(table_ref.at[pl.ds(row, 1), :],
                                   buf_ref.at[pl.ds(j, 1), :],
                                   sems.at[j])
        cp.start()
        copies.append(cp)
    for cp in copies:
        cp.wait()

    out_ref[...] = buf_ref[...]


def input_embedding(token_ids, embed_table, *, tile_n=8):
    """token_ids: (B, S) int; embed_table: (vocab, d_model)
    returns (B, S, d_model) == nn.Embedding(vocab, d_model)(token_ids)."""
    B, S = token_ids.shape
    vocab, d_model = embed_table.shape
    N = B * S

    # Lane-dense output: pad d_model up to a multiple of 128 (a no-op for real
    # model dims, which are already 128-multiples).
    d_pad = ((d_model + 127) // 128) * 128
    table = embed_table
    if d_pad != d_model:
        table = jnp.pad(table, ((0, 0), (0, d_pad - d_model)))

    # Pad the token stream to a multiple of tile_n; padded slots gather row 0
    # and are sliced away afterwards (handles arbitrary B*S).
    n_pad = pl.cdiv(N, tile_n) * tile_n
    ids_flat = token_ids.reshape(N).astype(jnp.int32)
    # Clamp ids so an out-of-range id can never become an OOB HBM DMA.
    # TODO(synk): PyTorch raises on OOB ids; a pl.debug_check could mirror that.
    ids_flat = jnp.clip(ids_flat, 0, vocab - 1)
    if n_pad != N:
        ids_flat = jnp.pad(ids_flat, (0, n_pad - N))

    out_flat = pl.pallas_call(
        _embedding_gather_kernel,
        out_shape=jax.ShapeDtypeStruct((n_pad, d_pad), table.dtype),
        grid_spec=pltpu.PrefetchScalarGridSpec(
            num_scalar_prefetch=1,                       # ids -> SMEM
            grid=(n_pad // tile_n,),
            in_specs=[
                pl.BlockSpec(memory_space=pl.ANY),       # table stays in HBM
            ],
            out_specs=pl.BlockSpec((tile_n, d_pad), lambda i, ids: (i, 0)),
            scratch_shapes=[
                pltpu.VMEM((tile_n, d_pad), table.dtype),
                pltpu.SemaphoreType.DMA((tile_n,)),
            ],
        ),
        compiler_params=pltpu.CompilerParams(
            dimension_semantics=("parallel",),           # shard token tiles over TCs
        ),
    )(ids_flat, table)

    return out_flat[:N, :d_model].reshape(B, S, d_model)


if __name__ == "__main__":
    # Small, module-consistent shapes.
    B, S = 2, 8
    vocab_size, d_model = 32, 32

    key = jax.random.PRNGKey(0)
    k_tab, k_ids = jax.random.split(key)

    # nn.Embedding default init: weight ~ N(0, 1)
    embed_table = jax.random.normal(k_tab, (vocab_size, d_model), dtype=jnp.float32)
    token_ids = jax.random.randint(k_ids, (B, S), 0, vocab_size, dtype=jnp.int32)

    out = input_embedding(token_ids, embed_table)
    out = jax.block_until_ready(out)

    # Reference check (plain JAX gather == PyTorch nn.Embedding forward).
    ref = embed_table[token_ids]
    assert out.shape == (B, S, d_model)
    assert jnp.allclose(out, ref, atol=1e-6, rtol=1e-6)

    print("KERNEL_OK")
</pallas_src>

<mosaic_0001>
module attributes {stable_mosaic.version = 11 : i64} {
  func.func @_embedding_gather_kernel(%arg0: i32, %arg1: memref<16xi32, #tpu.memory_space<smem>>, %arg2: memref<32x128xf32, #tpu.memory_space<any>>, %arg3: memref<8x128xf32, #tpu.memory_space<vmem>>, %arg4: memref<8x128xf32, #tpu.memory_space<vmem>>, %arg5: memref<8x!tpu.dma_semaphore, #tpu.memory_space<semaphore_mem>>) attributes {dimension_semantics = [#tpu.dimension_semantics<parallel>], iteration_bounds = array<i64: 2>, scalar_prefetch = 1 : i64, scratch_operands = 2 : i64, tpu.core_type = #tpu.core_type<tc>, window_params = [{}, {transform_indices = @transform_1, window_bounds = array<i64: 8, 128>}]} {
    %c8_i32 = arith.constant 8 : i32
    %0 = arith.muli %arg0, %c8_i32 : i32
    %c0_i32 = arith.constant 0 : i32
    %1 = arith.addi %0, %c0_i32 : i32
    %2 = arith.index_cast %1 : i32 to index
    %3 = memref.load %arg1[%2] : memref<16xi32, #tpu.memory_space<smem>>
    %c0_i32_0 = arith.constant 0 : i32
    %c0_i32_1 = arith.constant 0 : i32
    %4 = tpu.memref_slice %arg2[%3, %c0_i32_1] : memref<32x128xf32, #tpu.memory_space<any>> -> memref<1x128xf32, #tpu.memory_space<any>>
    %c0_i32_2 = arith.constant 0 : i32
    %c0_i32_3 = arith.constant 0 : i32
    %5 = tpu.memref_slice %arg4[%c0_i32_2, %c0_i32_3] : memref<8x128xf32, #tpu.memory_space<vmem>> -> memref<1x128xf32, #tpu.memory_space<vmem>>
    %6 = tpu.memref_slice %arg5[%c0_i32_0] : memref<8x!tpu.dma_semaphore, #tpu.memory_space<semaphore_mem>> -> memref<1x!tpu.dma_semaphore, #tpu.memory_space<semaphore_mem>>
    %7 = tpu.memref_squeeze %6 : memref<1x!tpu.dma_semaphore, #tpu.memory_space<semaphore_mem>> -> memref<!tpu.dma_semaphore, #tpu.memory_space<semaphore_mem>>
    tpu.enqueue_dma source(%4 : memref<1x128xf32, #tpu.memory_space<any>>) target(%5 : memref<1x128xf32, #tpu.memory_space<vmem>>) target_semaphore(%7 : memref<!tpu.dma_semaphore, #tpu.memory_space<semaphore_mem>>)
    %c8_i32_4 = arith.constant 8 : i32
    %8 = arith.muli %arg0, %c8_i32_4 : i32
    %c1_i32 = arith.constant 1 : i32
    %9 = arith.addi %8, %c1_i32 : i32
    %10 = arith.index_cast %9 : i32 to index
    %11 = memref.load %arg1[%10] : memref<16xi32, #tpu.memory_space<smem>>
    %c1_i32_5 = arith.constant 1 : i32
    %c0_i32_6 = arith.constant 0 : i32
    %12 = tpu.memref_slice %arg2[%11, %c0_i32_6] : memref<32x128xf32, #tpu.memory_space<any>> -> memref<1x128xf32, #tpu.memory_space<any>>
    %c1_i32_7 = arith.constant 1 : i32
    %c0_i32_8 = arith.constant 0 : i32
    %13 = tpu.memref_slice %arg4[%c1_i32_7, %c0_i32_8] : memref<8x128xf32, #tpu.memory_space<vmem>> -> memref<1x128xf32, #tpu.memory_space<vmem>>
    %14 = tpu.memref_slice %arg5[%c1_i32_5] : memref<8x!tpu.dma_semaphore, #tpu.memory_space<semaphore_mem>> -> memref<1x!tpu.dma_semaphore, #tpu.memory_space<semaphore_mem>>
    %15 = tpu.memref_squeeze %14 : memref<1x!tpu.dma_semaphore, #tpu.memory_space<semaphore_mem>> -> memref<!tpu.dma_semaphore, #tpu.memory_space<semaphore_mem>>
    tpu.enqueue_dma source(%12 : memref<1x128xf32, #tpu.memory_space<any>>) target(%13 : memref<1x128xf32, #tpu.memory_space<vmem>>) target_semaphore(%15 : memref<!tpu.dma_semaphore, #tpu.memory_space<semaphore_mem>>)
    %c8_i32_9 = arith.constant 8 : i32
    %16 = arith.muli %arg0, %c8_i32_9 : i32
    %c2_i32 = arith.constant 2 : i32
    %17 = arith.addi %16, %c2_i32 : i32
    %18 = arith.index_cast %17 : i32 to index
    %19 = memref.load %arg1[%18] : memref<16xi32, #tpu.memory_space<smem>>
    %c2_i32_10 = arith.constant 2 : i32
    %c0_i32_11 = arith.constant 0 : i32
    %20 = tpu.memref_slice %arg2[%19, %c0_i32_11] : memref<32x128xf32, #tpu.memory_space<any>> -> memref<1x128xf32, #tpu.memory_space<any>>
    %c2_i32_12 = arith.constant 2 : i32
    %c0_i32_13 = arith.constant 0 : i32
    %21 = tpu.memref_slice %arg4[%c2_i32_12, %c0_i32_13] : memref<8x128xf32, #tpu.memory_space<vmem>> -> memref<1x128xf32, #tpu.memory_space<vmem>>
    %22 = tpu.memref_slice %arg5[%c2_i32_10] : memref<8x!tpu.dma_semaphore, #tpu.memory_space<semaphore_mem>> -> memref<1x!tpu.dma_semaphore, #tpu.memory_space<semaphore_mem>>
    %23 = tpu.memref_squeeze %22 : memref<1x!tpu.dma_semaphore, #tpu.memory_space<semaphore_mem>> -> memref<!tpu.dma_semaphore, #tpu.memory_space<semaphore_mem>>
    tpu.enqueue_dma source(%20 : memref<1x128xf32, #tpu.memory_space<any>>) target(%21 : memref<1x128xf32, #tpu.memory_space<vmem>>) target_semaphore(%23 : memref<!tpu.dma_semaphore, #tpu.memory_space<semaphore_mem>>)
    %c8_i32_14 = arith.constant 8 : i32
    %24 = arith.muli %arg0, %c8_i32_14 : i32
    %c3_i32 = arith.constant 3 : i32
    %25 = arith.addi %24, %c3_i32 : i32
    %26 = arith.index_cast %25 : i32 to index
    %27 = memref.load %arg1[%26] : memref<16xi32, #tpu.memory_space<smem>>
    %c3_i32_15 = arith.constant 3 : i32
    %c0_i32_16 = arith.constant 0 : i32
    %28 = tpu.memref_slice %arg2[%27, %c0_i32_16] : memref<32x128xf32, #tpu.memory_space<any>> -> memref<1x128xf32, #tpu.memory_space<any>>
    %c3_i32_17 = arith.constant 3 : i32
    %c0_i32_18 = arith.constant 0 : i32
    %29 = tpu.memref_slice %arg4[%c3_i32_17, %c0_i32_18] : memref<8x128xf32, #tpu.memory_space<vmem>> -> memref<1x128xf32, #tpu.memory_space<vmem>>
    %30 = tpu.memref_slice %arg5[%c3_i32_15] : memref<8x!tpu.dma_semaphore, #tpu.memory_space<semaphore_mem>> -> memref<1x!tpu.dma_semaphore, #tpu.memory_space<semaphore_mem>>
    %31 = tpu.memref_squeeze %30 : memref<1x!tpu.dma_semaphore, #tpu.memory_space<semaphore_mem>> -> memref<!tpu.dma_semaphore, #tpu.memory_space<semaphore_mem>>
    tpu.enqueue_dma source(%28 : memref<1x128xf32, #tpu.memory_space<any>>) target(%29 : memref<1x128xf32, #tpu.memory_space<vmem>>) target_semaphore(%31 : memref<!tpu.dma_semaphore, #tpu.memory_space<semaphore_mem>>)
    %c8_i32_19 = arith.constant 8 : i32
    %32 = arith.muli %arg0, %c8_i32_19 : i32
    %c4_i32 = arith.constant 4 : i32
    %33 = arith.addi %32, %c4_i32 : i32
    %34 = arith.index_cast %33 : i32 to index
    %35 = memref.load %arg1[%34] : memref<16xi32, #tpu.memory_space<smem>>
    %c4_i32_20 = arith.constant 4 : i32
    %c0_i32_21 = arith.constant 0 : i32
    %36 = tpu.memref_slice %arg2[%35, %c0_i32_21] : memref<32x128xf32, #tpu.memory_space<any>> -> memref<1x128xf32, #tpu.memory_space<any>>
    %c4_i32_22 = arith.constant 4 : i32
    %c0_i32_23 = arith.constant 0 : i32
    %37 = tpu.memref_slice %arg4[%c4_i32_22, %c0_i32_23] : memref<8x128xf32, #tpu.memory_space<vmem>> -> memref<1x128xf32, #tpu.memory_space<vmem>>
    %38 = tpu.memref_slice %arg5[%c4_i32_20] : memref<8x!tpu.dma_semaphore, #tpu.memory_space<semaphore_mem>> -> memref<1x!tpu.dma_semaphore, #tpu.memory_space<semaphore_mem>>
    %39 = tpu.memref_squeeze %38 : memref<1x!tpu.dma_semaphore, #tpu.memory_space<semaphore_mem>> -> memref<!tpu.dma_semaphore, #tpu.memory_space<semaphore_mem>>
    tpu.enqueue_dma source(%36 : memref<1x128xf32, #tpu.memory_space<any>>) target(%37 : memref<1x128xf32, #tpu.memory_space<vmem>>) target_semaphore(%39 : memref<!tpu.dma_semaphore, #tpu.memory_space<semaphore_mem>>)
    %c8_i32_24 = arith.constant 8 : i32
    %40 = arith.muli %arg0, %c8_i32_24 : i32
    %c5_i32 = arith.constant 5 : i32
    %41 = arith.addi %40, %c5_i32 : i32
    %42 = arith.index_cast %41 : i32 to index
    %43 = memref.load %arg1[%42] : memref<16xi32, #tpu.memory_space<smem>>
    %c5_i32_25 = arith.constant 5 : i32
    %c0_i32_26 = arith.constant 0 : i32
    %44 = tpu.memref_slice %arg2[%43, %c0_i32_26] : memref<32x128xf32, #tpu.memory_space<any>> -> memref<1x128xf32, #tpu.memory_space<any>>
    %c5_i32_27 = arith.constant 5 : i32
    %c0_i32_28 = arith.constant 0 : i32
    %45 = tpu.memref_slice %arg4[%c5_i32_27, %c0_i32_28] : memref<8x128xf32, #tpu.memory_space<vmem>> -> memref<1x128xf32, #tpu.memory_space<vmem>>
    %46 = tpu.memref_slice %arg5[%c5_i32_25] : memref<8x!tpu.dma_semaphore, #tpu.memory_space<semaphore_mem>> -> memref<1x!tpu.dma_semaphore, #tpu.memory_space<semaphore_mem>>
    %47 = tpu.memref_squeeze %46 : memref<1x!tpu.dma_semaphore, #tpu.memory_space<semaphore_mem>> -> memref<!tpu.dma_semaphore, #tpu.memory_space<semaphore_mem>>
    tpu.enqueue_dma source(%44 : memref<1x128xf32, #tpu.memory_space<any>>) target(%45 : memref<1x128xf32, #tpu.memory_space<vmem>>) target_semaphore(%47 : memref<!tpu.dma_semaphore, #tpu.memory_space<semaphore_mem>>)
    %c8_i32_29 = arith.constant 8 : i32
    %48 = arith.muli %arg0, %c8_i32_29 : i32
    %c6_i32 = arith.constant 6 : i32
    %49 = arith.addi %48, %c6_i32 : i32
    %50 = arith.index_cast %49 : i32 to index
    %51 = memref.load %arg1[%50] : memref<16xi32, #tpu.memory_space<smem>>
    %c6_i32_30 = arith.constant 6 : i32
    %c0_i32_31 = arith.constant 0 : i32
    %52 = tpu.memref_slice %arg2[%51, %c0_i32_31] : memref<32x128xf32, #tpu.memory_space<any>> -> memref<1x128xf32, #tpu.memory_space<any>>
    %c6_i32_32 = arith.constant 6 : i32
    %c0_i32_33 = arith.constant 0 : i32
    %53 = tpu.memref_slice %arg4[%c6_i32_32, %c0_i32_33] : memref<8x128xf32, #tpu.memory_space<vmem>> -> memref<1x128xf32, #tpu.memory_space<vmem>>
    %54 = tpu.memref_slice %arg5[%c6_i32_30] : memref<8x!tpu.dma_semaphore, #tpu.memory_space<semaphore_mem>> -> memref<1x!tpu.dma_semaphore, #tpu.memory_space<semaphore_mem>>
    %55 = tpu.memref_squeeze %54 : memref<1x!tpu.dma_semaphore, #tpu.memory_space<semaphore_mem>> -> memref<!tpu.dma_semaphore, #tpu.memory_space<semaphore_mem>>
    tpu.enqueue_dma source(%52 : memref<1x128xf32, #tpu.memory_space<any>>) target(%53 : memref<1x128xf32, #tpu.memory_space<vmem>>) target_semaphore(%55 : memref<!tpu.dma_semaphore, #tpu.memory_space<semaphore_mem>>)
    %c8_i32_34 = arith.constant 8 : i32
    %56 = arith.muli %arg0, %c8_i32_34 : i32
    %c7_i32 = arith.constant 7 : i32
    %57 = arith.addi %56, %c7_i32 : i32
    %58 = arith.index_cast %57 : i32 to index
    %59 = memref.load %arg1[%58] : memref<16xi32, #tpu.memory_space<smem>>
    %c7_i32_35 = arith.constant 7 : i32
    %c0_i32_36 = arith.constant 0 : i32
    %60 = tpu.memref_slice %arg2[%59, %c0_i32_36] : memref<32x128xf32, #tpu.memory_space<any>> -> memref<1x128xf32, #tpu.memory_space<any>>
    %c7_i32_37 = arith.constant 7 : i32
    %c0_i32_38 = arith.constant 0 : i32
    %61 = tpu.memref_slice %arg4[%c7_i32_37, %c0_i32_38] : memref<8x128xf32, #tpu.memory_space<vmem>> -> memref<1x128xf32, #tpu.memory_space<vmem>>
    %62 = tpu.memref_slice %arg5[%c7_i32_35] : memref<8x!tpu.dma_semaphore, #tpu.memory_space<semaphore_mem>> -> memref<1x!tpu.dma_semaphore, #tpu.memory_space<semaphore_mem>>
    %63 = tpu.memref_squeeze %62 : memref<1x!tpu.dma_semaphore, #tpu.memory_space<semaphore_mem>> -> memref<!tpu.dma_semaphore, #tpu.memory_space<semaphore_mem>>
    tpu.enqueue_dma source(%60 : memref<1x128xf32, #tpu.memory_space<any>>) target(%61 : memref<1x128xf32, #tpu.memory_space<vmem>>) target_semaphore(%63 : memref<!tpu.dma_semaphore, #tpu.memory_space<semaphore_mem>>)
    %c0_i32_39 = arith.constant 0 : i32
    %c0_i32_40 = arith.constant 0 : i32
    %64 = tpu.memref_slice %arg2[%3, %c0_i32_40] : memref<32x128xf32, #tpu.memory_space<any>> -> memref<1x128xf32, #tpu.memory_space<any>>
    %c0_i32_41 = arith.constant 0 : i32
    %c0_i32_42 = arith.constant 0 : i32
    %65 = tpu.memref_slice %arg4[%c0_i32_41, %c0_i32_42] : memref<8x128xf32, #tpu.memory_space<vmem>> -> memref<1x128xf32, #tpu.memory_space<vmem>>
    %66 = tpu.memref_slice %arg5[%c0_i32_39] : memref<8x!tpu.dma_semaphore, #tpu.memory_space<semaphore_mem>> -> memref<1x!tpu.dma_semaphore, #tpu.memory_space<semaphore_mem>>
    %67 = tpu.memref_squeeze %66 : memref<1x!tpu.dma_semaphore, #tpu.memory_space<semaphore_mem>> -> memref<!tpu.dma_semaphore, #tpu.memory_space<semaphore_mem>>
    tpu.wait_dma2 semaphore(%67 : memref<!tpu.dma_semaphore, #tpu.memory_space<semaphore_mem>>) src(%64 : memref<1x128xf32, #tpu.memory_space<any>>) dst(%65 : memref<1x128xf32, #tpu.memory_space<vmem>>)
    %c1_i32_43 = arith.constant 1 : i32
    %c0_i32_44 = arith.constant 0 : i32
    %68 = tpu.memref_slice %arg2[%11, %c0_i32_44] : memref<32x128xf32, #tpu.memory_space<any>> -> memref<1x128xf32, #tpu.memory_space<any>>
    %c1_i32_45 = arith.constant 1 : i32
    %c0_i32_46 = arith.constant 0 : i32
    %69 = tpu.memref_slice %arg4[%c1_i32_45, %c0_i32_46] : memref<8x128xf32, #tpu.memory_space<vmem>> -> memref<1x128xf32, #tpu.memory_space<vmem>>
    %70 = tpu.memref_slice %arg5[%c1_i32_43] : memref<8x!tpu.dma_semaphore, #tpu.memory_space<semaphore_mem>> -> memref<1x!tpu.dma_semaphore, #tpu.memory_space<semaphore_mem>>
    %71 = tpu.memref_squeeze %70 : memref<1x!tpu.dma_semaphore, #tpu.memory_space<semaphore_mem>> -> memref<!tpu.dma_semaphore, #tpu.memory_space<semaphore_mem>>
    tpu.wait_dma2 semaphore(%71 : memref<!tpu.dma_semaphore, #tpu.memory_space<semaphore_mem>>) src(%68 : memref<1x128xf32, #tpu.memory_space<any>>) dst(%69 : memref<1x128xf32, #tpu.memory_space<vmem>>)
    %c2_i32_47 = arith.constant 2 : i32
    %c0_i32_48 = arith.constant 0 : i32
    %72 = tpu.memref_slice %arg2[%19, %c0_i32_48] : memref<32x128xf32, #tpu.memory_space<any>> -> memref<1x128xf32, #tpu.memory_space<any>>
    %c2_i32_49 = arith.constant 2 : i32
    %c0_i32_50 = arith.constant 0 : i32
    %73 = tpu.memref_slice %arg4[%c2_i32_49, %c0_i32_50] : memref<8x128xf32, #tpu.memory_space<vmem>> -> memref<1x128xf32, #tpu.memory_space<vmem>>
    %74 = tpu.memref_slice %arg5[%c2_i32_47] : memref<8x!tpu.dma_semaphore, #tpu.memory_space<semaphore_mem>> -> memref<1x!tpu.dma_semaphore, #tpu.memory_space<semaphore_mem>>
    %75 = tpu.memref_squeeze %74 : memref<1x!tpu.dma_semaphore, #tpu.memory_space<semaphore_mem>> -> memref<!tpu.dma_semaphore, #tpu.memory_space<semaphore_mem>>
    tpu.wait_dma2 semaphore(%75 : memref<!tpu.dma_semaphore, #tpu.memory_space<semaphore_mem>>) src(%72 : memref<1x128xf32, #tpu.memory_space<any>>) dst(%73 : memref<1x128xf32, #tpu.memory_space<vmem>>)
    %c3_i32_51 = arith.constant 3 : i32
    %c0_i32_52 = arith.constant 0 : i32
    %76 = tpu.memref_slice %arg2[%27, %c0_i32_52] : memref<32x128xf32, #tpu.memory_space<any>> -> memref<1x128xf32, #tpu.memory_space<any>>
    %c3_i32_53 = arith.constant 3 : i32
    %c0_i32_54 = arith.constant 0 : i32
    %77 = tpu.memref_slice %arg4[%c3_i32_53, %c0_i32_54] : memref<8x128xf32, #tpu.memory_space<vmem>> -> memref<1x128xf32, #tpu.memory_space<vmem>>
    %78 = tpu.memref_slice %arg5[%c3_i32_51] : memref<8x!tpu.dma_semaphore, #tpu.memory_space<semaphore_mem>> -> memref<1x!tpu.dma_semaphore, #tpu.memory_space<semaphore_mem>>
    %79 = tpu.memref_squeeze %78 : memref<1x!tpu.dma_semaphore, #tpu.memory_space<semaphore_mem>> -> memref<!tpu.dma_semaphore, #tpu.memory_space<semaphore_mem>>
    tpu.wait_dma2 semaphore(%79 : memref<!tpu.dma_semaphore, #tpu.memory_space<semaphore_mem>>) src(%76 : memref<1x128xf32, #tpu.memory_space<any>>) dst(%77 : memref<1x128xf32, #tpu.memory_space<vmem>>)
    %c4_i32_55 = arith.constant 4 : i32
    %c0_i32_56 = arith.constant 0 : i32
    %80 = tpu.memref_slice %arg2[%35, %c0_i32_56] : memref<32x128xf32, #tpu.memory_space<any>> -> memref<1x128xf32, #tpu.memory_space<any>>
    %c4_i32_57 = arith.constant 4 : i32
    %c0_i32_58 = arith.constant 0 : i32
    %81 = tpu.memref_slice %arg4[%c4_i32_57, %c0_i32_58] : memref<8x128xf32, #tpu.memory_space<vmem>> -> memref<1x128xf32, #tpu.memory_space<vmem>>
    %82 = tpu.memref_slice %arg5[%c4_i32_55] : memref<8x!tpu.dma_semaphore, #tpu.memory_space<semaphore_mem>> -> memref<1x!tpu.dma_semaphore, #tpu.memory_space<semaphore_mem>>
    %83 = tpu.memref_squeeze %82 : memref<1x!tpu.dma_semaphore, #tpu.memory_space<semaphore_mem>> -> memref<!tpu.dma_semaphore, #tpu.memory_space<semaphore_mem>>
    tpu.wait_dma2 semaphore(%83 : memref<!tpu.dma_semaphore, #tpu.memory_space<semaphore_mem>>) src(%80 : memref<1x128xf32, #tpu.memory_space<any>>) dst(%81 : memref<1x128xf32, #tpu.memory_space<vmem>>)
    %c5_i32_59 = arith.constant 5 : i32
    %c0_i32_60 = arith.constant 0 : i32
    %84 = tpu.memref_slice %arg2[%43, %c0_i32_60] : memref<32x128xf32, #tpu.memory_space<any>> -> memref<1x128xf32, #tpu.memory_space<any>>
    %c5_i32_61 = arith.constant 5 : i32
    %c0_i32_62 = arith.constant 0 : i32
    %85 = tpu.memref_slice %arg4[%c5_i32_61, %c0_i32_62] : memref<8x128xf32, #tpu.memory_space<vmem>> -> memref<1x128xf32, #tpu.memory_space<vmem>>
    %86 = tpu.memref_slice %arg5[%c5_i32_59] : memref<8x!tpu.dma_semaphore, #tpu.memory_space<semaphore_mem>> -> memref<1x!tpu.dma_semaphore, #tpu.memory_space<semaphore_mem>>
    %87 = tpu.memref_squeeze %86 : memref<1x!tpu.dma_semaphore, #tpu.memory_space<semaphore_mem>> -> memref<!tpu.dma_semaphore, #tpu.memory_space<semaphore_mem>>
    tpu.wait_dma2 semaphore(%87 : memref<!tpu.dma_semaphore, #tpu.memory_space<semaphore_mem>>) src(%84 : memref<1x128xf32, #tpu.memory_space<any>>) dst(%85 : memref<1x128xf32, #tpu.memory_space<vmem>>)
    %c6_i32_63 = arith.constant 6 : i32
    %c0_i32_64 = arith.constant 0 : i32
    %88 = tpu.memref_slice %arg2[%51, %c0_i32_64] : memref<32x128xf32, #tpu.memory_space<any>> -> memref<1x128xf32, #tpu.memory_space<any>>
    %c6_i32_65 = arith.constant 6 : i32
    %c0_i32_66 = arith.constant 0 : i32
    %89 = tpu.memref_slice %arg4[%c6_i32_65, %c0_i32_66] : memref<8x128xf32, #tpu.memory_space<vmem>> -> memref<1x128xf32, #tpu.memory_space<vmem>>
    %90 = tpu.memref_slice %arg5[%c6_i32_63] : memref<8x!tpu.dma_semaphore, #tpu.memory_space<semaphore_mem>> -> memref<1x!tpu.dma_semaphore, #tpu.memory_space<semaphore_mem>>
    %91 = tpu.memref_squeeze %90 : memref<1x!tpu.dma_semaphore, #tpu.memory_space<semaphore_mem>> -> memref<!tpu.dma_semaphore, #tpu.memory_space<semaphore_mem>>
    tpu.wait_dma2 semaphore(%91 : memref<!tpu.dma_semaphore, #tpu.memory_space<semaphore_mem>>) src(%88 : memref<1x128xf32, #tpu.memory_space<any>>) dst(%89 : memref<1x128xf32, #tpu.memory_space<vmem>>)
    %c7_i32_67 = arith.constant 7 : i32
    %c0_i32_68 = arith.constant 0 : i32
    %92 = tpu.memref_slice %arg2[%59, %c0_i32_68] : memref<32x128xf32, #tpu.memory_space<any>> -> memref<1x128xf32, #tpu.memory_space<any>>
    %c7_i32_69 = arith.constant 7 : i32
    %c0_i32_70 = arith.constant 0 : i32
    %93 = tpu.memref_slice %arg4[%c7_i32_69, %c0_i32_70] : memref<8x128xf32, #tpu.memory_space<vmem>> -> memref<1x128xf32, #tpu.memory_space<vmem>>
    %94 = tpu.memref_slice %arg5[%c7_i32_67] : memref<8x!tpu.dma_semaphore, #tpu.memory_space<semaphore_mem>> -> memref<1x!tpu.dma_semaphore, #tpu.memory_space<semaphore_mem>>
    %95 = tpu.memref_squeeze %94 : memref<1x!tpu.dma_semaphore, #tpu.memory_space<semaphore_mem>> -> memref<!tpu.dma_semaphore, #tpu.memory_space<semaphore_mem>>
    tpu.wait_dma2 semaphore(%95 : memref<!tpu.dma_semaphore, #tpu.memory_space<semaphore_mem>>) src(%92 : memref<1x128xf32, #tpu.memory_space<any>>) dst(%93 : memref<1x128xf32, #tpu.memory_space<vmem>>)
    %c0 = arith.constant 0 : index
    %c0_71 = arith.constant 0 : index
    %96 = vector.load %arg4[%c0, %c0_71] : memref<8x128xf32, #tpu.memory_space<vmem>>, vector<8x128xf32>
    %c0_72 = arith.constant 0 : index
    %c0_73 = arith.constant 0 : index
    %97 = vector.load %arg3[%c0_72, %c0_73] : memref<8x128xf32, #tpu.memory_space<vmem>>, vector<8x128xf32>
    tpu.vector_store %arg3[%c0_72, %c0_73], %96 {strides = array<i32>} : memref<8x128xf32, #tpu.memory_space<vmem>>, vector<8x128xf32>,
    return
  }
  func.func @transform_1(%arg0: i32, %arg1: memref<16xi32, #tpu.memory_space<smem>>) -> (i32, i32) {
    %c0_i32 = arith.constant 0 : i32
    %c0_i32_0 = arith.constant 0 : i32
    return %arg0, %c0_i32 : i32, i32
  }
}

</mosaic_0001>

<llo_original>
// kernel: tpu_custom_call.1
$region0: #{tpu_custom_call.1}
  #allocation0 [shape = 'u32[]', space=smem, size = 0x4, offset = 0x4, fixed_abs, tag = 'smem constant byte address 0x4 - core index']
  #allocation1 [shape = 'u32[144,128]{1,0:T(1,128)}', space=vmem, size = 0x12000, scoped, tag = 'internal scratch']
  #allocation2 [shape = 'f32[8,128]{1,0:T(8,128)}', space=vmem, size = 0x1000, scoped, tag = 'scratch operand']
  #allocation3 [shape = 's32[8]{0}', space=sflag, size = 0x20, scoped, tag = 'scratch operand']
  #allocation4 [shape = 's32[1]{0}', space=sflag, size = 0x4, scoped, tag = 'scoped memory for tpu_custom_call.1']
  #allocation5 [shape = 'u8[512]{0}', space=smem, size = 0x200, scoped, tag = 'prefetched SMEM operand 0']
  #allocation8 [shape = 's32[]', space=sflag, size = 0x4, offset = 0, fixed_abs, tag = 'sflag constant byte address 0x0 - dummy sync flag']
  #allocation9 [shape = 's32[]', space=sflag, size = 0x4, offset = 0, fixed_abs, tag = 'sflag constant byte address 0x0 - dummy sync flag']
  #allocation10 [shape = 'u32[]', space=smem, size = 0x4, offset = 0x44, fixed_abs, tag = 'smem constant byte address 0x44 - assertion arg 0']
  #allocation11 [shape = 'u32[]', space=smem, size = 0x4, offset = 0x48, fixed_abs, tag = 'smem constant byte address 0x48 - assertion arg 1']
  #allocation12 [shape = 's32[]', space=sflag, size = 0x4, offset = 0, fixed_abs, tag = 'sflag constant byte address 0x0 - dummy sync flag']
  #allocation13 [shape = 's32[]', space=sflag, size = 0x4, offset = 0, fixed_abs, tag = 'sflag constant byte address 0x0 - dummy sync flag']
  #allocation14 [shape = 's32[]', space=sflag, size = 0x4, offset = 0, fixed_abs, tag = 'sflag constant byte address 0x0 - dummy sync flag']
  #allocation15 [shape = 's32[]', space=sflag, size = 0x4, offset = 0, fixed_abs, tag = 'sflag constant byte address 0x0 - dummy sync flag']
  #allocation16 [shape = 's32[]', space=sflag, size = 0x4, offset = 0, fixed_abs, tag = 'sflag constant byte address 0x0 - dummy sync flag']
  #allocation17 [shape = 's32[]', space=sflag, size = 0x4, offset = 0, fixed_abs, tag = 'sflag constant byte address 0x0 - dummy sync flag']
  #allocation18 [shape = 's32[]', space=sflag, size = 0x4, offset = 0, fixed_abs, tag = 'sflag constant byte address 0x0 - dummy sync flag']
  #allocation19 [shape = 's32[]', space=sflag, size = 0x4, offset = 0, fixed_abs, tag = 'sflag constant byte address 0x0 - dummy sync flag']
  #allocation20 [shape = 's32[]', space=sflag, size = 0x4, offset = 0, fixed_abs, tag = 'sflag constant byte address 0x0 - dummy sync flag']
  #allocation21 [shape = 's32[]', space=sflag, size = 0x4, offset = 0, fixed_abs, tag = 'sflag constant byte address 0x0 - dummy sync flag']
  #allocation22 [shape = 's32[]', space=sflag, size = 0x4, offset = 0, fixed_abs, tag = 'sflag constant byte address 0x0 - dummy sync flag']
  #allocation23 [shape = 's32[]', space=sflag, size = 0x4, offset = 0, fixed_abs, tag = 'sflag constant byte address 0x0 - dummy sync flag']
  #allocation24 [shape = 's32[]', space=sflag, size = 0x4, offset = 0, fixed_abs, tag = 'sflag constant byte address 0x0 - dummy sync flag']
  #allocation25 [shape = 's32[]', space=sflag, size = 0x4, offset = 0, fixed_abs, tag = 'sflag constant byte address 0x0 - dummy sync flag']
  %s0 = inlined_call_operand.hbm [shape: s32[16], index: 0, kind: input, shape index: {}]
  %s1 = inlined_call_operand.hbm [shape: f32[32,128], index: 1, kind: input, shape index: {}]
  %s2 = inlined_call_operand.hbm [shape: f32[16,128], index: 2, kind: output, shape index: {}]
  %s3 = sld [smem:[#allocation0]]
  $region57: #{tpu_custom_call.1} parent=0
    _
  %s5 = ssub.s32 1, %s3
  %s6 = scalar_select 0, %s5, %s3
  %8 = dma.hbm_to_smem %s0, 16, [#allocation5], [#allocation4]
  %9 = dma.done [#allocation4], 16
  %10 = sfence
  $region1: #{tpu_custom_call.1} parent=0
    #allocation6 [shape = 'u8[8192]{0}', space=vmem, size = 0x2000, scoped, tag = 'output window, operand 0']
    #allocation7 [shape = 's32[2]{0}', space=sflag, size = 0x8, scoped, tag = 'scoped memory for tpu_custom_call.1']
    %11 = vsyncpa [#allocation7], 0
    %s12 = scalar_lea.sflag [#allocation7], 1
    %13 = vsyncpa %s12, 0
    loop: start=0, step=1, limit=3
    $region2: #{tpu_custom_call.1} parent=1 // loop_pre_header
      _
    $region3: #{tpu_custom_call.1} parent=1 // loop_header
      %s15 = sphi 0, %s19
      %p16 = scmp.ge.s32.totalorder %s15, 3
      %s24 = sphi 0, %s26
      %s27 = sphi 0, %s24
      %s37 = sphi 0, %s27
    $region4: #{tpu_custom_call.1} parent=1 // loop_header_branch
      %18 = sbr.rel (%p16) target = $region8
    $region5: #{tpu_custom_call.1} parent=1 // loop_body
      %s20 = ssub.s32 %s15, 1
      %s21 = sadd.s32 %s15, 1
      %s22 = ssub.s32 %s15, %s21
      %p23 = scmp.eq.s32.totalorder %s22, 0
      %s25 = sadd.s32 %s24, 1
      %s26 = scalar_select %p23, %s24, %s25
      %p28 = pneg %p23
      %p29 = scmp.eq.s32.totalorder %s15, 1
      %p30 = por %p28, %p29
      %p31 = scmp.ne.s32.totalorder %s24, %s27
      %p32 = scmp.eq.s32.totalorder %s15, 0
      %p33 = por %p31, %p32
      %p34 = scmp.ne.s32.totalorder %s24, %s27
      %p35 = scmp.eq.s32.totalorder %s20, 1
      %p36 = por %p34, %p35
      %p38 = scmp.ne.s32.totalorder %s27, %s37
      %p39 = scmp.eq.s32.totalorder %s20, 0
      %p40 = por %p38, %p39
      %p41 = scmp.lt.s32.totalorder %s15, 2
      // Predicated region
      $region9: #{tpu_custom_call.1} parent=5 // pred_check
        %p42 = pneg %p41
      $region10: #{tpu_custom_call.1} parent=5 // pred_check_branch
        %44 = sbr.rel (%p42) target = $region12
      $region11: #{tpu_custom_call.1} parent=5 // pred_region
        %p45 = pneg %p33
        %p46 = pneg %p30
        %s47 = sand.u32 %s24, 1
        %s48 = scalar_lea.sflag [#allocation7], %s47
        %s49 = sand.u32 %s24, 1
        %s50 = smul.addr %s49, 8
        %s51 = scalar_lea.vmem [#allocation6], %s50
        %s52 = smul.u32 %s15, 8
        %s53 = sld [smem:[#allocation5 + %s52]]
        %s54 = smul.addr %s53, 16
        %s55 = scalar_lea.hbm %s1, %s54
        // Predicated region
        $region13: #{tpu_custom_call.1} parent=11 // pred_check
          _
        $region14: #{tpu_custom_call.1} parent=11 // pred_check_branch
          %57 = sbr.rel target = $region16
        $region15: #{tpu_custom_call.1} parent=11 // pred_region
          %58 = sst [smem:[#allocation10]] [#allocation9]
          %59 = sst [smem:[#allocation11]] [#allocation8]
        $region16: #{tpu_custom_call.1} parent=11 // pred_fallthru
          _
        %61 = shalt.err (0)
        %s63 = sshll.u32 [#allocation2], 4
        %s64 = int_to_ptr.vmem [resolvable:$true] %s63
        %66 = dma.hbm_to_vmem [thread:$0]  %s55, 16, %s64, [#allocation3]
        %s67 = sadd.s32 %s52, 1
        %s68 = sld [smem:[#allocation5 + %s67]]
        %s69 = smul.addr %s68, 16
        %s70 = scalar_lea.hbm %s1, %s69
        %s71 = scalar_lea.vmem [#allocation2], 1
        %s72 = scalar_lea.sflag [#allocation3], 1
        // Predicated region
        $region17: #{tpu_custom_call.1} parent=11 // pred_check
          _
        $region18: #{tpu_custom_call.1} parent=11 // pred_check_branch
          %74 = sbr.rel target = $region20
        $region19: #{tpu_custom_call.1} parent=11 // pred_region
          %75 = sst [smem:[#allocation10]] [#allocation13]
          %76 = sst [smem:[#allocation11]] [#allocation12]
        $region20: #{tpu_custom_call.1} parent=11 // pred_fallthru
          _
        %78 = shalt.err (0)
        %s80 = sshll.u32 %s71, 4
        %s81 = int_to_ptr.vmem [resolvable:$true] %s80
        %83 = dma.hbm_to_vmem [thread:$0]  %s70, 16, %s81, %s72
        %s84 = sadd.s32 %s52, 2
        %s85 = sld [smem:[#allocation5 + %s84]]
        %s86 = smul.addr %s85, 16
        %s87 = scalar_lea.hbm %s1, %s86
        %s88 = scalar_lea.vmem [#allocation2], 2
        %s89 = scalar_lea.sflag [#allocation3], 2
        // Predicated region
        $region21: #{tpu_custom_call.1} parent=11 // pred_check
          _
        $region22: #{tpu_custom_call.1} parent=11 // pred_check_branch
          %91 = sbr.rel target = $region24
        $region23: #{tpu_custom_call.1} parent=11 // pred_region
          %92 = sst [smem:[#allocation10]] [#allocation15]
          %93 = sst [smem:[#allocation11]] [#allocation14]
        $region24: #{tpu_custom_call.1} parent=11 // pred_fallthru
          _
        %95 = shalt.err (0)
        %s97 = sshll.u32 %s88, 4
        %s98 = int_to_ptr.vmem [resolvable:$true] %s97
        %100 = dma.hbm_to_vmem [thread:$0]  %s87, 16, %s98, %s89
        %s101 = sadd.s32 %s52, 3
        %s102 = sld [smem:[#allocation5 + %s101]]
        %s103 = smul.addr %s102, 16
        %s104 = scalar_lea.hbm %s1, %s103
        %s105 = scalar_lea.vmem [#allocation2], 3
        %s106 = scalar_lea.sflag [#allocation3], 3
        // Predicated region
        $region25: #{tpu_custom_call.1} parent=11 // pred_check
          _
        $region26: #{tpu_custom_call.1} parent=11 // pred_check_branch
          %108 = sbr.rel target = $region28
        $region27: #{tpu_custom_call.1} parent=11 // pred_region
          %109 = sst [smem:[#allocation10]] [#allocation17]
          %110 = sst [smem:[#allocation11]] [#allocation16]
        $region28: #{tpu_custom_call.1} parent=11 // pred_fallthru
          _
        %112 = shalt.err (0)
        %s114 = sshll.u32 %s105, 4
        %s115 = int_to_ptr.vmem [resolvable:$true] %s114
        %117 = dma.hbm_to_vmem [thread:$0]  %s104, 16, %s115, %s106
        %s118 = sadd.s32 %s52, 4
        %s119 = sld [smem:[#allocation5 + %s118]]
        %s120 = smul.addr %s119, 16
        %s121 = scalar_lea.hbm %s1, %s120
        %s122 = scalar_lea.vmem [#allocation2], 4
        %s123 = scalar_lea.sflag [#allocation3], 4
        // Predicated region
        $region29: #{tpu_custom_call.1} parent=11 // pred_check
          _
        $region30: #{tpu_custom_call.1} parent=11 // pred_check_branch
          %125 = sbr.rel target = $region32
        $region31: #{tpu_custom_call.1} parent=11 // pred_region
          %126 = sst [smem:[#allocation10]] [#allocation19]
          %127 = sst [smem:[#allocation11]] [#allocation18]
        $region32: #{tpu_custom_call.1} parent=11 // pred_fallthru
          _
        %129 = shalt.err (0)
        %s131 = sshll.u32 %s122, 4
        %s132 = int_to_ptr.vmem [resolvable:$true] %s131
        %134 = dma.hbm_to_vmem [thread:$0]  %s121, 16, %s132, %s123
        %s135 = sadd.s32 %s52, 5
        %s136 = sld [smem:[#allocation5 + %s135]]
        %s137 = smul.addr %s136, 16
        %s138 = scalar_lea.hbm %s1, %s137
        %s139 = scalar_lea.vmem [#allocation2], 5
        %s140 = scalar_lea.sflag [#allocation3], 5
        // Predicated region
        $region33: #{tpu_custom_call.1} parent=11 // pred_check
          _
        $region34: #{tpu_custom_call.1} parent=11 // pred_check_branch
          %142 = sbr.rel target = $region36
        $region35: #{tpu_custom_call.1} parent=11 // pred_region
          %143 = sst [smem:[#allocation10]] [#allocation21]
          %144 = sst [smem:[#allocation11]] [#allocation20]
        $region36: #{tpu_custom_call.1} parent=11 // pred_fallthru
          _
        %146 = shalt.err (0)
        %s148 = sshll.u32 %s139, 4
        %s149 = int_to_ptr.vmem [resolvable:$true] %s148
        %151 = dma.hbm_to_vmem [thread:$0]  %s138, 16, %s149, %s140
        %s152 = sadd.s32 %s52, 6
        %s153 = sld [smem:[#allocation5 + %s152]]
        %s154 = smul.addr %s153, 16
        %s155 = scalar_lea.hbm %s1, %s154
        %s156 = scalar_lea.vmem [#allocation2], 6
        %s157 = scalar_lea.sflag [#allocation3], 6
        // Predicated region
        $region37: #{tpu_custom_call.1} parent=11 // pred_check
          _
        $region38: #{tpu_custom_call.1} parent=11 // pred_check_branch
          %159 = sbr.rel target = $region40
        $region39: #{tpu_custom_call.1} parent=11 // pred_region
          %160 = sst [smem:[#allocation10]] [#allocation23]
          %161 = sst [smem:[#allocation11]] [#allocation22]
        $region40: #{tpu_custom_call.1} parent=11 // pred_fallthru
          _
        %163 = shalt.err (0)
        %s165 = sshll.u32 %s156, 4
        %s166 = int_to_ptr.vmem [resolvable:$true] %s165
        %168 = dma.hbm_to_vmem [thread:$0]  %s155, 16, %s166, %s157
        %s169 = sadd.s32 %s52, 7
        %s170 = sld [smem:[#allocation5 + %s169]]
        %s171 = smul.addr %s170, 16
        %s172 = scalar_lea.hbm %s1, %s171
        %s173 = scalar_lea.vmem [#allocation2], 7
        %s174 = scalar_lea.sflag [#allocation3], 7
        // Predicated region
        $region41: #{tpu_custom_call.1} parent=11 // pred_check
          _
        $region42: #{tpu_custom_call.1} parent=11 // pred_check_branch
          %176 = sbr.rel target = $region44
        $region43: #{tpu_custom_call.1} parent=11 // pred_region
          %177 = sst [smem:[#allocation10]] [#allocation25]
          %178 = sst [smem:[#allocation11]] [#allocation24]
        $region44: #{tpu_custom_call.1} parent=11 // pred_fallthru
          _
        %180 = shalt.err (0)
        %s182 = sshll.u32 %s173, 4
        %s183 = int_to_ptr.vmem [resolvable:$true] %s182
        %185 = dma.hbm_to_vmem [thread:$0]  %s172, 16, %s183, %s174
        %s186 = smul.u32 1, 1
        %s187 = sshll.u32 %s186, 4
        %188 = dma.done [#allocation3], %s187
        %s189 = sshll.u32 %s186, 4
        %190 = dma.done %s72, %s189
        %s191 = sshll.u32 %s186, 4
        %192 = dma.done %s89, %s191
        %s193 = sshll.u32 %s186, 4
        %194 = dma.done %s106, %s193
        %s195 = sshll.u32 %s186, 4
        %196 = dma.done %s123, %s195
        %s197 = sshll.u32 %s186, 4
        %198 = dma.done %s140, %s197
        %s199 = sshll.u32 %s186, 4
        %200 = dma.done %s157, %s199
        %s201 = sshll.u32 %s186, 4
        %202 = dma.done %s174, %s201
        %v203 = vld [vmem:[#allocation2] sm:$0xff]
        %204 = vst [vmem:[%s51] sm:$0xff] %v203
        %s205 = sand.u32 %s24, 1
        %s206 = scalar_lea.sflag [#allocation7], %s205
        %s207 = sand.u32 %s24, 1
        %s208 = smul.addr %s207, 8
        %s209 = scalar_lea.vmem [#allocation6], %s208
        // Predicated region
        $region45: #{tpu_custom_call.1} parent=11 // pred_check
          %p210 = pneg %p30
        $region46: #{tpu_custom_call.1} parent=11 // pred_check_branch
          %212 = sbr.rel (%p210) target = $region48
        $region47: #{tpu_custom_call.1} parent=11 // pred_region
          %s214 = ssub.s32 128, 128
          %215 = vsyncadd %s206, %s214
          %s216 = smul.addr %s15, 128
          %s217 = scalar_lea.hbm %s2, %s216
          %s219 = sshll.u32 %s209, 4
          %s220 = int_to_ptr.vmem [resolvable:$true] %s219
          %222 = dma.vmem_to_hbm [thread:$0]  %s220, 128, %s217, %s206
        $region48: #{tpu_custom_call.1} parent=11 // pred_fallthru
          _
      $region12: #{tpu_custom_call.1} parent=5 // pred_fallthru
        _
      %p223 = scmp.le.s32.totalorder 1, %s15
      // Predicated region
      $region49: #{tpu_custom_call.1} parent=5 // pred_check
        %p224 = pneg %p223
      $region50: #{tpu_custom_call.1} parent=5 // pred_check_branch
        %226 = sbr.rel (%p224) target = $region52
      $region51: #{tpu_custom_call.1} parent=5 // pred_region
        %s227 = ssub.s32 %s15, 1
        // Predicated region
        $region53: #{tpu_custom_call.1} parent=51 // pred_check
          %p228 = pneg %p36
        $region54: #{tpu_custom_call.1} parent=51 // pred_check_branch
          %230 = sbr.rel (%p228) target = $region56
        $region55: #{tpu_custom_call.1} parent=51 // pred_region
          %s231 = sand.u32 %s27, 1
          %s232 = scalar_lea.sflag [#allocation7], %s231
          %s233 = sand.u32 %s27, 1
          %s234 = smul.addr %s233, 8
          %s235 = scalar_lea.vmem [#allocation6], %s234
          %236 = dma.done %s232, 128
        $region56: #{tpu_custom_call.1} parent=51 // pred_fallthru
          _
      $region52: #{tpu_custom_call.1} parent=5 // pred_fallthru
        _
    $region6: #{tpu_custom_call.1} parent=1 // loop_footer
      %s19 = sadd.s32 1, %s15
    $region7: #{tpu_custom_call.1} parent=1 // loop_footer_branch
      %14 = sbr.rel target = $region3
    $region8: #{tpu_custom_call.1} parent=1 // loop_exit
      _
    %237 = vsyncpa [#allocation7], 1
    %s238 = scalar_lea.sflag [#allocation7], 1
    %239 = vsyncpa %s238, 1
  %240 = vsyncmov [#allocation3]
  %s241 = vpop.sfrf %240
  %p242 = scmp.eq.s32.totalorder %s241, 0
  %p243 = pneg %p242
  %245 = shalt.err (%p243)
  %s246 = scalar_lea.sflag [#allocation3], 1
  %247 = vsyncmov %s246
  %s248 = vpop.sfrf %247
  %p249 = scmp.eq.s32.totalorder %s248, 0
  %p250 = pneg %p249
  %252 = shalt.err (%p250)
  %s253 = scalar_lea.sflag [#allocation3], 2
  %254 = vsyncmov %s253
  %s255 = vpop.sfrf %254
  %p256 = scmp.eq.s32.totalorder %s255, 0
  %p257 = pneg %p256
  %259 = shalt.err (%p257)
  %s260 = scalar_lea.sflag [#allocation3], 3
  %261 = vsyncmov %s260
  %s262 = vpop.sfrf %261
  %p263 = scmp.eq.s32.totalorder %s262, 0
  %p264 = pneg %p263
  %266 = shalt.err (%p264)
  %s267 = scalar_lea.sflag [#allocation3], 4
  %268 = vsyncmov %s267
  %s269 = vpop.sfrf %268
  %p270 = scmp.eq.s32.totalorder %s269, 0
  %p271 = pneg %p270
  %273 = shalt.err (%p271)
  %s274 = scalar_lea.sflag [#allocation3], 5
  %275 = vsyncmov %s274
  %s276 = vpop.sfrf %275
  %p277 = scmp.eq.s32.totalorder %s276, 0
  %p278 = pneg %p277
  %280 = shalt.err (%p278)
  %s281 = scalar_lea.sflag [#allocation3], 6
  %282 = vsyncmov %s281
  %s283 = vpop.sfrf %282
  %p284 = scmp.eq.s32.totalorder %s283, 0
  %p285 = pneg %p284
  %287 = shalt.err (%p285)
  %s288 = scalar_lea.sflag [#allocation3], 7
  %289 = vsyncmov %s288
  %s290 = vpop.sfrf %289
  %p291 = scmp.eq.s32.totalorder %s290, 0
  %p292 = pneg %p291
  %294 = shalt.err (%p292)

</llo_original>
